<compile_context>
chip_gen: v5e
topology: v5e:2x2
jax: 0.10.0
libtpu: 0.0.40
codegen_flags: <defaults>
</compile_context>

<pallas_src>
import jax
import jax.numpy as jnp
import numpy as np
from jax.experimental import pallas as pl
from jax.experimental.pallas import tpu as pltpu

EPS = 1e-5
LANE = 128


def _round_up(x, m):
    return (x + m - 1) // m * m


def _pick_tile_h(H, W, target_rows=2048):
    th = max(1, min(H, target_rows // max(W, 1)))
    while H % th:
        th -= 1
    return th


def _vmem_limit_bytes():
    # Budget per generation (v7x: 64 MiB VMEM, v5e/v6e: 128 MiB).
    try:
        cap = pltpu.get_tpu_info().vmem_capacity_bytes
    except Exception:
        cap = 64 * 1024 * 1024
    return int(min(cap // 2, 96 * 1024 * 1024))


def _conv3x3_kernel(xp_ref, w_ref, y_ref, stats_ref):
    """One (batch element, row-tile) step of a 3x3 SAME conv (no bias).

    xp_ref:    (1, H+2, W+2, Cin)   spatially zero-padded input image
    w_ref:     (Kpad, Cout) bf16    weights flattened as dx*3*Cin + dy*Cin + ci
    y_ref:     (1, TH, W, Cout) f32 raw (pre-BN) conv output row-tile
    stats_ref: (1, 1, 2, Cout) f32  per-tile [sum, sum-of-squares] partials
    """
    t = pl.program_id(1)
    _, TH, W, Cout = y_ref.shape
    Cin = xp_ref.shape[3]
    Kpad = w_ref.shape[0]
    K = 9 * Cin

    row0 = pl.multiple_of(t * TH, TH)
    # Cast the activation to bf16 ONCE, before any im2col shuffling.
    xt = xp_ref[0, pl.ds(row0, TH + 2), :, :].astype(jnp.bfloat16)  # (TH+2,W+2,Cin)

    # im2col via two nested lane-dim concats (no per-tap narrow reshapes):
    # K index = dx*3*Cin + dy*Cin + ci (the wrapper flattens weights the same
    # way).  Zero-pad K up to Kpad so the MXU LHS is lane-dense.
    rows = jnp.concatenate([xt[0:TH], xt[1:TH + 1], xt[2:TH + 2]], axis=-1)
    patch = jnp.concatenate(
        [rows[:, 0:W], rows[:, 1:W + 1], rows[:, 2:W + 2]], axis=-1)
    if Kpad > K:
        patch = jnp.concatenate(
            [patch, jnp.zeros((TH, W, Kpad - K), jnp.bfloat16)], axis=-1)
    patch = patch.reshape(TH * W, Kpad)

    # Single fused big-K MXU dot with f32 accumulation.
    # TODO(synk): on v7x, 9 accumulated K=Cin dots (MRB accumulates in place)
    # can replace this if the patch ever limits TILE_H under 64 MiB VMEM.
    y = jnp.dot(patch, w_ref[...], preferred_element_type=jnp.float32)

    y_ref[0] = y.reshape(TH, W, Cout)
    # Phase 1 of the two-phase BatchNorm reduction: per-tile partial sums.
    s = jnp.sum(y, axis=0, keepdims=True)
    ss = jnp.sum(y * y, axis=0, keepdims=True)
    stats_ref[0, 0] = jnp.concatenate([s, ss], axis=0)


def _bn_relu_kernel(y_ref, scale_ref, shift_ref, o_ref):
    """Elementwise folded-BatchNorm (scale/shift) + ReLU over one row-tile."""
    y = y_ref[...].astype(jnp.float32)
    o_ref[...] = jnp.maximum(y * scale_ref[...] + shift_ref[...], 0.0
                             ).astype(o_ref.dtype)


def _conv3x3(x_nhwc, w_hwio, tile_h):
    N, H, W, Cin = x_nhwc.shape
    Cout = w_hwio.shape[-1]
    num_t = H // tile_h
    K = 9 * Cin
    Kpad = _round_up(K, LANE)

    # Spatial (halo) zero-padding only -- channels keep their true width.
    xp = jnp.pad(x_nhwc, ((0, 0), (1, 1), (1, 1), (0, 0)))
    # Flatten HWIO weights dx-major to match the kernel's patch layout; pad K.
    wk = jnp.transpose(w_hwio, (1, 0, 2, 3)).reshape(K, Cout)
    wk = jnp.pad(wk, ((0, Kpad - K), (0, 0))).astype(jnp.bfloat16)

    itemsize = x_nhwc.dtype.itemsize
    cost = pl.CostEstimate(
        flops=2 * N * H * W * K * Cout,
        transcendentals=0,
        bytes_accessed=int(N * (H + 2) * (W + 2) * Cin * itemsize
                           + Kpad * Cout * 2
                           + N * H * W * Cout * 4
                           + N * num_t * 2 * Cout * 4))

    y_raw, stats = pl.pallas_call(
        _conv3x3_kernel,
        out_shape=(jax.ShapeDtypeStruct((N, H, W, Cout), jnp.float32),
                   jax.ShapeDtypeStruct((N, num_t, 2, Cout), jnp.float32)),
        grid=(N, num_t),
        in_specs=[
            # Full padded image per batch element (small at true channel width).
            # TODO(synk): for very tall images, stream halo'd row-tiles with a
            # manual double-buffered DMA instead of a full-image input block.
            pl.BlockSpec((1, H + 2, W + 2, Cin), lambda n, t: (n, 0, 0, 0)),
            pl.BlockSpec((Kpad, Cout), lambda n, t: (0, 0)),
        ],
        out_specs=(
            pl.BlockSpec((1, tile_h, W, Cout), lambda n, t: (n, t, 0, 0)),
            pl.BlockSpec((1, 1, 2, Cout), lambda n, t: (n, t, 0, 0)),
        ),
        compiler_params=pltpu.CompilerParams(
            dimension_semantics=("parallel", "parallel"),
            vmem_limit_bytes=_vmem_limit_bytes()),
        cost_estimate=cost,
    )(xp, wk)
    return y_raw, stats


def _bn_fold(stats, gamma, beta, count):
    """Phase 2 of the BN reduction: fold batch stats into scale/shift."""
    s = jnp.sum(stats, axis=(0, 1))                      # (2, C)
    mean = s[0] / count
    var = jnp.maximum(s[1] / count - mean * mean, 0.0)   # biased, clamped
    scale = gamma / jnp.sqrt(var + EPS)
    shift = beta - mean * scale
    return (scale.reshape(1, 1, 1, -1).astype(jnp.float32),
            shift.reshape(1, 1, 1, -1).astype(jnp.float32))


def _bn_relu(y_raw, scale, shift, tile_h, out_dtype):
    N, H, W, C = y_raw.shape
    num_t = H // tile_h
    return pl.pallas_call(
        _bn_relu_kernel,
        out_shape=jax.ShapeDtypeStruct((N, H, W, C), out_dtype),
        grid=(N, num_t),
        in_specs=[
            pl.BlockSpec((1, tile_h, W, C), lambda n, t: (n, t, 0, 0)),
            pl.BlockSpec((1, 1, 1, C), lambda n, t: (0, 0, 0, 0)),
            pl.BlockSpec((1, 1, 1, C), lambda n, t: (0, 0, 0, 0)),
        ],
        out_specs=pl.BlockSpec((1, tile_h, W, C), lambda n, t: (n, t, 0, 0)),
        compiler_params=pltpu.CompilerParams(
            dimension_semantics=("parallel", "parallel"),
            vmem_limit_bytes=_vmem_limit_bytes()),
    )(y_raw, scale, shift)


def double_conv(x_nchw, params, tile_h=None):
    """x_nchw: (N, Cin, H, W) f32 -> (N, Cout, H, W) f32 (train-mode BN)."""
    N, Cin, H, W = x_nchw.shape
    Cout = params["w1"].shape[-1]
    if tile_h is None:
        tile_h = _pick_tile_h(H, W)
    assert H % tile_h == 0, (H, tile_h)
    count = N * H * W

    # NCHW -> NHWC at true channel width (no 128-lane channel padding in HBM).
    x = jnp.transpose(x_nchw, (0, 2, 3, 1))

    # Conv1 -> two-phase BN1 -> ReLU (intermediate activation kept in bf16;
    # conv bias intentionally dropped: the batch mean cancels it exactly).
    y1_raw, st1 = _conv3x3(x, params["w1"], tile_h)
    sc1, sh1 = _bn_fold(st1, params["g1"], params["be1"], count)
    y1_act = _bn_relu(y1_raw, sc1, sh1, tile_h, jnp.bfloat16)

    # Conv2 -> two-phase BN2 -> ReLU.
    y2_raw, st2 = _conv3x3(y1_act, params["w2"], tile_h)
    sc2, sh2 = _bn_fold(st2, params["g2"], params["be2"], count)
    out = _bn_relu(y2_raw, sc2, sh2, tile_h, jnp.float32)

    return jnp.transpose(out, (0, 3, 1, 2))


def reference_forward(x_nchw, params):
    """Pure-JAX f32 reference (NCHW), mirrors PyTorch train-mode DoubleConv."""
    dn = ("NCHW", "OIHW", "NCHW")

    def block(x, w_hwio, b, g, be):
        w_oihw = jnp.transpose(w_hwio, (3, 2, 0, 1))
        y = jax.lax.conv_general_dilated(x, w_oihw, (1, 1), "SAME",
                                         dimension_numbers=dn)
        y = y + b[None, :, None, None]
        mean = y.mean(axis=(0, 2, 3), keepdims=True)
        var = ((y - mean) ** 2).mean(axis=(0, 2, 3), keepdims=True)
        y = (y - mean) / jnp.sqrt(var + EPS)
        y = y * g[None, :, None, None] + be[None, :, None, None]
        return jnp.maximum(y, 0.0)

    y = block(x_nchw, params["w1"], params["b1"], params["g1"], params["be1"])
    y = block(y, params["w2"], params["b2"], params["g2"], params["be2"])
    return y


def make_params(key, in_channels, out_channels):
    ks = jax.random.split(key, 8)
    return {
        "w1": 0.1 * jax.random.normal(ks[0], (3, 3, in_channels, out_channels), jnp.float32),
        "b1": 0.1 * jax.random.normal(ks[1], (out_channels,), jnp.float32),
        "g1": 1.0 + 0.1 * jax.random.normal(ks[2], (out_channels,), jnp.float32),
        "be1": 0.1 * jax.random.normal(ks[3], (out_channels,), jnp.float32),
        "w2": 0.1 * jax.random.normal(ks[4], (3, 3, out_channels, out_channels), jnp.float32),
        "b2": 0.1 * jax.random.normal(ks[5], (out_channels,), jnp.float32),
        "g2": 1.0 + 0.1 * jax.random.normal(ks[6], (out_channels,), jnp.float32),
        "be2": 0.1 * jax.random.normal(ks[7], (out_channels,), jnp.float32),
    }


if __name__ == "__main__":
    N, Cin, Cout, H, W = 2, 4, 8, 16, 16
    key = jax.random.PRNGKey(0)
    kx, kp = jax.random.split(key)
    x = jax.random.normal(kx, (N, Cin, H, W), jnp.float32)
    params = make_params(kp, Cin, Cout)

    # tile_h=8 -> grid (N=2, row-tiles=2): exercises the cross-tile BN partials.
    out = jax.block_until_ready(double_conv(x, params, tile_h=8))
    ref = jax.block_until_ready(reference_forward(x, params))

    assert out.shape == (N, Cout, H, W), out.shape
    # bf16 MXU operands (f32 accumulation) vs. the f32 reference -> relaxed tol.
    np.testing.assert_allclose(np.asarray(out), np.asarray(ref),
                               rtol=5e-2, atol=5e-2)
    print("KERNEL_OK")
</pallas_src>

<mosaic_0001>
module attributes {stable_mosaic.version = 11 : i64} {
  func.func @_conv3x3_kernel(%arg0: i32, %arg1: i32, %arg2: memref<1x18x18x4xf32, #tpu.memory_space<vmem>>, %arg3: memref<128x8xbf16, #tpu.memory_space<vmem>>, %arg4: memref<1x8x16x8xf32, #tpu.memory_space<vmem>>, %arg5: memref<1x1x2x8xf32, #tpu.memory_space<vmem>>) attributes {dimension_semantics = [#tpu.dimension_semantics<parallel>, #tpu.dimension_semantics<parallel>], iteration_bounds = array<i64: 2, 2>, scalar_prefetch = 0 : i64, scratch_operands = 0 : i64, tpu.core_type = #tpu.core_type<tc>, window_params = [{transform_indices = @transform_0, window_bounds = array<i64: 1, 18, 18, 4>}, {pipeline_mode = #tpu.pipeline_mode<synchronous>, transform_indices = @transform_1, window_bounds = array<i64: 128, 8>}, {transform_indices = @transform_2, window_bounds = array<i64: 1, 8, 16, 8>}, {transform_indices = @transform_3, window_bounds = array<i64: 1, 1, 2, 8>}]} {
    %c8_i32 = arith.constant 8 : i32
    %0 = arith.muli %arg1, %c8_i32 : i32
    %1 = tpu.assume_multiple %0, 8 : i32
    %c0 = arith.constant 0 : index
    %2 = arith.index_cast %1 : i32 to index
    %c0_0 = arith.constant 0 : index
    %c0_1 = arith.constant 0 : index
    %3 = vector.load %arg2[%c0, %2, %c0_0, %c0_1] : memref<1x18x18x4xf32, #tpu.memory_space<vmem>>, vector<1x10x18x4xf32>
    %4 = vector.shape_cast %3 : vector<1x10x18x4xf32> to vector<10x18x4xf32>
    %5 = arith.truncf %4 : vector<10x18x4xf32> to vector<10x18x4xbf16>
    %6 = vector.extract_strided_slice %5 {offsets = [0, 0, 0], sizes = [8, 18, 4], strides = [1, 1, 1]} : vector<10x18x4xbf16> to vector<8x18x4xbf16>
    %7 = vector.extract_strided_slice %5 {offsets = [1, 0, 0], sizes = [8, 18, 4], strides = [1, 1, 1]} : vector<10x18x4xbf16> to vector<8x18x4xbf16>
    %8 = vector.extract_strided_slice %5 {offsets = [2, 0, 0], sizes = [8, 18, 4], strides = [1, 1, 1]} : vector<10x18x4xbf16> to vector<8x18x4xbf16>
    %9 = tpu.concatenate %6, %7, %8 in 2 : vector<8x18x4xbf16>, vector<8x18x4xbf16>, vector<8x18x4xbf16> -> vector<8x18x12xbf16>
    %10 = vector.extract_strided_slice %9 {offsets = [0, 0, 0], sizes = [8, 16, 12], strides = [1, 1, 1]} : vector<8x18x12xbf16> to vector<8x16x12xbf16>
    %11 = vector.extract_strided_slice %9 {offsets = [0, 1, 0], sizes = [8, 16, 12], strides = [1, 1, 1]} : vector<8x18x12xbf16> to vector<8x16x12xbf16>
    %12 = vector.extract_strided_slice %9 {offsets = [0, 2, 0], sizes = [8, 16, 12], strides = [1, 1, 1]} : vector<8x18x12xbf16> to vector<8x16x12xbf16>
    %13 = tpu.concatenate %10, %11, %12 in 2 : vector<8x16x12xbf16>, vector<8x16x12xbf16>, vector<8x16x12xbf16> -> vector<8x16x36xbf16>
    %cst = arith.constant 0.000000e+00 : bf16
    %14 = vector.broadcast %cst : bf16 to vector<8x16x92xbf16>
    %15 = tpu.concatenate %13, %14 in 2 : vector<8x16x36xbf16>, vector<8x16x92xbf16> -> vector<8x16x128xbf16>
    %16 = vector.shape_cast %15 : vector<8x16x128xbf16> to vector<128x128xbf16>
    %c0_2 = arith.constant 0 : index
    %c0_3 = arith.constant 0 : index
    %17 = vector.load %arg3[%c0_2, %c0_3] : memref<128x8xbf16, #tpu.memory_space<vmem>>, vector<128x8xbf16>
    %cst_4 = arith.constant dense<0.000000e+00> : vector<128x8xf32>
    %18 = tpu.matmul %16, %17, %cst_4 {dimension_numbers = #tpu.dot_dimension_numbers<[1], [0], [0], [1], [0, 0, 1, 1], [], []>} : vector<128x128xbf16>, vector<128x8xbf16>, vector<128x8xf32> -> vector<128x8xf32>
    %19 = vector.shape_cast %18 : vector<128x8xf32> to vector<8x16x8xf32>
    %c0_5 = arith.constant 0 : index
    %c0_6 = arith.constant 0 : index
    %c0_7 = arith.constant 0 : index
    %c0_8 = arith.constant 0 : index
    %20 = vector.load %arg4[%c0_5, %c0_6, %c0_7, %c0_8] : memref<1x8x16x8xf32, #tpu.memory_space<vmem>>, vector<1x8x16x8xf32>
    %21 = vector.shape_cast %20 : vector<1x8x16x8xf32> to vector<8x16x8xf32>
    %22 = vector.shape_cast %19 : vector<8x16x8xf32> to vector<1x8x16x8xf32>
    tpu.vector_store %arg4[%c0_5, %c0_6, %c0_7, %c0_8], %22 {strides = array<i32>} : memref<1x8x16x8xf32, #tpu.memory_space<vmem>>, vector<1x8x16x8xf32>,
    %cst_9 = arith.constant dense<0.000000e+00> : vector<8xf32>
    %23 = vector.multi_reduction <add>, %18, %cst_9 [0] : vector<128x8xf32> to vector<8xf32>
    %24 = vector.shape_cast %23 : vector<8xf32> to vector<1x8xf32>
    %25 = arith.mulf %18, %18 : vector<128x8xf32>
    %cst_10 = arith.constant dense<0.000000e+00> : vector<8xf32>
    %26 = vector.multi_reduction <add>, %25, %cst_10 [0] : vector<128x8xf32> to vector<8xf32>
    %27 = vector.shape_cast %26 : vector<8xf32> to vector<1x8xf32>
    %28 = tpu.concatenate %24, %27 in 0 : vector<1x8xf32>, vector<1x8xf32> -> vector<2x8xf32>
    %c0_11 = arith.constant 0 : index
    %c0_12 = arith.constant 0 : index
    %c0_13 = arith.constant 0 : index
    %c0_14 = arith.constant 0 : index
    %29 = vector.load %arg5[%c0_11, %c0_12, %c0_13, %c0_14] : memref<1x1x2x8xf32, #tpu.memory_space<vmem>>, vector<1x1x2x8xf32>
    %30 = vector.shape_cast %29 : vector<1x1x2x8xf32> to vector<2x8xf32>
    %31 = vector.shape_cast %28 : vector<2x8xf32> to vector<1x1x2x8xf32>
    tpu.vector_store %arg5[%c0_11, %c0_12, %c0_13, %c0_14], %31 {strides = array<i32>} : memref<1x1x2x8xf32, #tpu.memory_space<vmem>>, vector<1x1x2x8xf32>,
    return
  }
  func.func @transform_0(%arg0: i32, %arg1: i32) -> (i32, i32, i32, i32) {
    %c0_i32 = arith.constant 0 : i32
    %c0_i32_0 = arith.constant 0 : i32
    %c0_i32_1 = arith.constant 0 : i32
    %c0_i32_2 = arith.constant 0 : i32
    return %arg0, %c0_i32, %c0_i32_0, %c0_i32_1 : i32, i32, i32, i32
  }
  func.func @transform_1(%arg0: i32, %arg1: i32) -> (i32, i32) {
    %c0_i32 = arith.constant 0 : i32
    %c0_i32_0 = arith.constant 0 : i32
    %c0_i32_1 = arith.constant 0 : i32
    return %c0_i32, %c0_i32_0 : i32, i32
  }
  func.func @transform_2(%arg0: i32, %arg1: i32) -> (i32, i32, i32, i32) {
    %c0_i32 = arith.constant 0 : i32
    %c0_i32_0 = arith.constant 0 : i32
    %c0_i32_1 = arith.constant 0 : i32
    return %arg0, %arg1, %c0_i32, %c0_i32_0 : i32, i32, i32, i32
  }
  func.func @transform_3(%arg0: i32, %arg1: i32) -> (i32, i32, i32, i32) {
    %c0_i32 = arith.constant 0 : i32
    %c0_i32_0 = arith.constant 0 : i32
    %c0_i32_1 = arith.constant 0 : i32
    return %arg0, %arg1, %c0_i32, %c0_i32_0 : i32, i32, i32, i32
  }
}

</mosaic_0001>

<llo_original>
// kernel: tpu_custom_call.1
$region0: #{tpu_custom_call.1}
  #allocation0 [shape = 'u32[]', space=smem, size = 0x4, offset = 0x4, fixed_abs, tag = 'smem constant byte address 0x4 - core index']
  #allocation1 [shape = 'u32[72,128]{1,0:T(1,128)}', space=vmem, size = 0x9000, scoped, tag = 'internal scratch']
  %s0 = inlined_call_operand.vmem [shape: f32[2,18,18,4], index: 0, kind: input, shape index: {}]
  %s1 = inlined_call_operand.vmem [shape: bf16[128,8], index: 1, kind: input, shape index: {}]
  %s2 = inlined_call_operand.vmem [shape: f32[2,16,16,8], index: 2, kind: output, shape index: {0}]
  %s3 = inlined_call_operand.hbm [shape: f32[2,2,2,8], index: 3, kind: output, shape index: {1}]
  %4 = xla_tuple %s2, %s3
  %s5 = sld [smem:[#allocation0]]
  $region49: #{tpu_custom_call.1} parent=0
    _
  %s7 = ssub.s32 1, %s5
  %s8 = scalar_select 0, %s7, %s5
  $region1: #{tpu_custom_call.1} parent=0
    #allocation2 [shape = 'u8[2048]{0}', space=vmem, size = 0x800, scoped, tag = 'output window, operand 1']
    #allocation3 [shape = 's32[2]{0}', space=sflag, size = 0x8, scoped, tag = 'scoped memory for tpu_custom_call.1']
    %9 = vsyncpa [#allocation3], 0
    %s10 = scalar_lea.sflag [#allocation3], 1
    %11 = vsyncpa %s10, 0
    loop: start=0, step=1, limit=6
    $region2: #{tpu_custom_call.1} parent=1 // loop_pre_header
      _
    $region3: #{tpu_custom_call.1} parent=1 // loop_header
      %s13 = sphi 0, %s17
      %p14 = scmp.ge.s32.totalorder %s13, 6
      %s20 = sphi 0, %s32
      %s21 = sphi 0, %s28
      %s22 = sphi 0, %s20
      %s23 = sphi 0, %s21
      %s24 = sphi 0, %s22
      %s25 = sphi 0, %s23
      %s35 = sphi 0, %s37
      %s38 = sphi 0, %s35
      %s39 = sphi 0, %s38
      %s55 = sphi 0, %s39
      %s59 = sphi 0, %s59
      %s61 = sphi 0, %s59
      %s62 = sphi 0, %s61
      %s76 = sphi 0, %s62
      %s84 = sphi 0, %s86
      %s87 = sphi 0, %s84
      %s88 = sphi 0, %s87
      %s104 = sphi 0, %s88
      %s112 = sphi 0, %s114
      %s115 = sphi 0, %s112
      %s116 = sphi 0, %s115
      %s132 = sphi 0, %s116
    $region4: #{tpu_custom_call.1} parent=1 // loop_header_branch
      %16 = sbr.rel (%p14) target = $region8
    $region5: #{tpu_custom_call.1} parent=1 // loop_body
      %s18 = ssub.s32 %s13, 1
      %s19 = ssub.s32 %s13, 2
      %s26 = sadd.s32 1, %s21
      %p27 = scmp.ge.s32.totalorder %s26, 2
      %s28 = scalar_select %p27, 0, %s26
      %s29 = sadd.s32 1, %s20
      %s30 = scalar_select %p27, %s29, %s20
      %p31 = scmp.ge.s32.totalorder %s30, 2
      %s32 = scalar_select %p31, 0, %s30
      %s33 = ssub.s32 %s20, %s32
      %p34 = scmp.eq.s32.totalorder %s33, 0
      %s36 = sadd.s32 %s35, 1
      %s37 = scalar_select %p34, %s35, %s36
      %p40 = pneg %p34
      %p41 = scmp.eq.s32.totalorder %s13, 3
      %p42 = por %p40, %p41
      %p43 = scmp.ne.s32.totalorder %s35, %s38
      %p44 = scmp.eq.s32.totalorder %s13, 0
      %p45 = por %p43, %p44
      %p46 = scmp.ne.s32.totalorder %s35, %s38
      %p47 = scmp.eq.s32.totalorder %s18, 3
      %p48 = por %p46, %p47
      %p49 = scmp.ne.s32.totalorder %s38, %s39
      %p50 = scmp.eq.s32.totalorder %s18, 0
      %p51 = por %p49, %p50
      %p52 = scmp.ne.s32.totalorder %s38, %s39
      %p53 = scmp.eq.s32.totalorder %s19, 3
      %p54 = por %p52, %p53
      %p56 = scmp.ne.s32.totalorder %s39, %s55
      %p57 = scmp.eq.s32.totalorder %s19, 0
      %p58 = por %p56, %p57
      %s60 = sadd.s32 %s59, 1
      %p63 = scmp.eq.s32.totalorder %s13, 3
      %p64 = scmp.ne.s32.totalorder %s59, %s61
      %p65 = scmp.eq.s32.totalorder %s13, 0
      %p66 = por %p64, %p65
      %p67 = scmp.ne.s32.totalorder %s59, %s61
      %p68 = scmp.eq.s32.totalorder %s18, 3
      %p69 = por %p67, %p68
      %p70 = scmp.ne.s32.totalorder %s61, %s62
      %p71 = scmp.eq.s32.totalorder %s18, 0
      %p72 = por %p70, %p71
      %p73 = scmp.ne.s32.totalorder %s61, %s62
      %p74 = scmp.eq.s32.totalorder %s19, 3
      %p75 = por %p73, %p74
      %p77 = scmp.ne.s32.totalorder %s62, %s76
      %p78 = scmp.eq.s32.totalorder %s19, 0
      %p79 = por %p77, %p78
      %s80 = ssub.s32 %s20, %s32
      %s81 = ssub.s32 %s21, %s28
      %s82 = sor.u32 %s80, %s81
      %p83 = scmp.eq.s32.totalorder %s82, 0
      %s85 = sadd.s32 %s84, 1
      %s86 = scalar_select %p83, %s84, %s85
      %p89 = pneg %p83
      %p90 = scmp.eq.s32.totalorder %s13, 3
      %p91 = por %p89, %p90
      %p92 = scmp.ne.s32.totalorder %s84, %s87
      %p93 = scmp.eq.s32.totalorder %s13, 0
      %p94 = por %p92, %p93
      %p95 = scmp.ne.s32.totalorder %s84, %s87
      %p96 = scmp.eq.s32.totalorder %s18, 3
      %p97 = por %p95, %p96
      %p98 = scmp.ne.s32.totalorder %s87, %s88
      %p99 = scmp.eq.s32.totalorder %s18, 0
      %p100 = por %p98, %p99
      %p101 = scmp.ne.s32.totalorder %s87, %s88
      %p102 = scmp.eq.s32.totalorder %s19, 3
      %p103 = por %p101, %p102
      %p105 = scmp.ne.s32.totalorder %s88, %s104
      %p106 = scmp.eq.s32.totalorder %s19, 0
      %p107 = por %p105, %p106
      %s108 = ssub.s32 %s20, %s32
      %s109 = ssub.s32 %s21, %s28
      %s110 = sor.u32 %s108, %s109
      %p111 = scmp.eq.s32.totalorder %s110, 0
      %s113 = sadd.s32 %s112, 1
      %s114 = scalar_select %p111, %s112, %s113
      %p117 = pneg %p111
      %p118 = scmp.eq.s32.totalorder %s13, 3
      %p119 = por %p117, %p118
      %p120 = scmp.ne.s32.totalorder %s112, %s115
      %p121 = scmp.eq.s32.totalorder %s13, 0
      %p122 = por %p120, %p121
      %p123 = scmp.ne.s32.totalorder %s112, %s115
      %p124 = scmp.eq.s32.totalorder %s18, 3
      %p125 = por %p123, %p124
      %p126 = scmp.ne.s32.totalorder %s115, %s116
      %p127 = scmp.eq.s32.totalorder %s18, 0
      %p128 = por %p126, %p127
      %p129 = scmp.ne.s32.totalorder %s115, %s116
      %p130 = scmp.eq.s32.totalorder %s19, 3
      %p131 = por %p129, %p130
      %p133 = scmp.ne.s32.totalorder %s116, %s132
      %p134 = scmp.eq.s32.totalorder %s19, 0
      %p135 = por %p133, %p134
      %p136 = scmp.le.s32.totalorder 1, %s13
      %p137 = scmp.lt.s32.totalorder %s13, 5
      %p138 = pnand %p136, %p137
      %p139 = pneg %p138
      // Predicated region
      $region9: #{tpu_custom_call.1} parent=5 // pred_check
        _
      $region10: #{tpu_custom_call.1} parent=5 // pred_check_branch
        %141 = sbr.rel (%p138) target = $region12
      $region11: #{tpu_custom_call.1} parent=5 // pred_region
        %s142 = ssub.s32 %s13, 1
        // Predicated region
        $region13: #{tpu_custom_call.1} parent=11 // pred_check
          %p143 = pneg %p72
        $region14: #{tpu_custom_call.1} parent=11 // pred_check_branch
          %145 = sbr.rel (%p143) target = $region16
        $region15: #{tpu_custom_call.1} parent=11 // pred_region
          _
        $region16: #{tpu_custom_call.1} parent=11 // pred_fallthru
          _
      $region12: #{tpu_custom_call.1} parent=5 // pred_fallthru
        _
      %p146 = scmp.lt.s32.totalorder %s13, 4
      // Predicated region
      $region17: #{tpu_custom_call.1} parent=5 // pred_check
        %p147 = pneg %p146
      $region18: #{tpu_custom_call.1} parent=5 // pred_check_branch
        %149 = sbr.rel (%p147) target = $region20
      $region19: #{tpu_custom_call.1} parent=5 // pred_region
        // Predicated region
        $region21: #{tpu_custom_call.1} parent=19 // pred_check
          %p150 = pneg %p45
        $region22: #{tpu_custom_call.1} parent=19 // pred_check_branch
          %152 = sbr.rel (%p150) target = $region24
        $region23: #{tpu_custom_call.1} parent=19 // pred_region
          %p153 = scmp.lt.s32.totalorder %s20, 1
          %s154 = scalar_select %p153, %s20, 1
          %s155 = smul.addr %s154, 54
          %s156 = smul.addr %s155, 8
          %s157 = scalar_lea.vmem %s0, %s156
        $region24: #{tpu_custom_call.1} parent=19 // pred_fallthru
          _
      $region20: #{tpu_custom_call.1} parent=5 // pred_fallthru
        _
      %p158 = scmp.le.s32.totalorder 1, %s13
      %p159 = scmp.lt.s32.totalorder %s13, 5
      %p160 = pnand %p158, %p159
      %p161 = pneg %p160
      // Predicated region
      $region25: #{tpu_custom_call.1} parent=5 // pred_check
        _
      $region26: #{tpu_custom_call.1} parent=5 // pred_check_branch
        %163 = sbr.rel (%p160) target = $region28
      $region27: #{tpu_custom_call.1} parent=5 // pred_region
        %s164 = ssub.s32 %s13, 1
        %p165 = scmp.lt.s32.totalorder %s22, 1
        %s166 = scalar_select %p165, %s22, 1
        %s167 = smul.addr %s166, 54
        %s168 = smul.addr %s167, 8
        %s169 = scalar_lea.vmem %s0, %s168
        %p170 = pneg %p51
        %p171 = pneg %p48
        %p172 = pneg %p72
        %p173 = pneg %p69
        %p174 = pneg %p100
        %p175 = pneg %p97
        %s176 = smul.u32 8, %s23
        %p177 = scmp.lt.s32.totalorder %s22, 1
        %s178 = scalar_select %p177, %s22, 1
        %p179 = scmp.lt.s32.totalorder %s176, 15
        %s180 = scalar_select %p179, %s176, 15
        %s181 = smul.addr %s180, 2
        %s182 = smul.addr %s178, 32
        %s183 = sadd.s32 %s181, %s182
        %s184 = smul.addr %s183, 8
        %s185 = scalar_lea.vmem %s2, %s184
        %p186 = pneg %p128
        %p187 = pneg %p125
        %s188 = sand.u32 %s115, 1
        %s189 = scalar_lea.sflag [#allocation3], %s188
        %s190 = sand.u32 %s115, 1
        %s191 = smul.addr %s190, 2
        %s192 = scalar_lea.vmem [#allocation2], %s191
        %p193 = scmp.lt.s32.totalorder %s22, 1
        %s194 = scalar_select %p193, %s22, 1
        %s195 = smul.addr %s194, 54
        %s196 = smul.addr %s195, 8
        %s197 = scalar_lea.vmem %s0, %s196
        %s198 = smul.u32 8, %s23
        %p199 = scmp.lt.s32.totalorder %s22, 1
        %s200 = scalar_select %p199, %s22, 1
        %p201 = scmp.lt.s32.totalorder %s198, 15
        %s202 = scalar_select %p201, %s198, 15
        %s203 = smul.addr %s202, 2
        %s204 = smul.addr %s200, 32
        %s205 = sadd.s32 %s203, %s204
        %s206 = smul.addr %s205, 8
        %s207 = scalar_lea.vmem %s2, %s206
        %s208 = smul.u32 8, %s23
        %s210 = smul.u32 %s23, 8
        %s211 = smul.u32 %s210, 24
        %s212 = scalar_lea.vmem %s197, %s211
        %v213 = vld [vmem:[%s212] sm:$0xff]
        %v214 = vld [vmem:[%s212 + $0x8] sm:$0xff]
        %v215 = vld [vmem:[%s212 + $0x10] sm:$0x3]
        %v216 = vld [vmem:[%s212 + $0x18] sm:$0xff]
        %v217 = vld [vmem:[%s212 + $0x20] sm:$0xff]
        %v218 = vld [vmem:[%s212 + $0x28] sm:$0x3]
        %v219 = vld [vmem:[%s212 + $0x30] sm:$0xff]
        %v220 = vld [vmem:[%s212 + $0x38] sm:$0xff]
        %v221 = vld [vmem:[%s212 + $0x40] sm:$0x3]
        %v222 = vld [vmem:[%s212 + $0x48] sm:$0xff]
        %v223 = vld [vmem:[%s212 + $0x50] sm:$0xff]
        %v224 = vld [vmem:[%s212 + $0x58] sm:$0x3]
        %v225 = vld [vmem:[%s212 + $0x60] sm:$0xff]
        %v226 = vld [vmem:[%s212 + $0x68] sm:$0xff]
        %v227 = vld [vmem:[%s212 + $0x70] sm:$0x3]
        %v228 = vld [vmem:[%s212 + $0x78] sm:$0xff]
        %v229 = vld [vmem:[%s212 + $0x80] sm:$0xff]
        %v230 = vld [vmem:[%s212 + $0x88] sm:$0x3]
        %v231 = vld [vmem:[%s212 + $0x90] sm:$0xff]
        %v232 = vld [vmem:[%s212 + $0x98] sm:$0xff]
        %v233 = vld [vmem:[%s212 + $0xa0] sm:$0x3]
        %v234 = vld [vmem:[%s212 + $0xa8] sm:$0xff]
        %v235 = vld [vmem:[%s212 + $0xb0] sm:$0xff]
        %v236 = vld [vmem:[%s212 + $0xb8] sm:$0x3]
        %v237 = vld [vmem:[%s212 + $0xc0] sm:$0xff]
        %v238 = vld [vmem:[%s212 + $0xc8] sm:$0xff]
        %v239 = vld [vmem:[%s212 + $0xd0] sm:$0x3]
        %v240 = vld [vmem:[%s212 + $0xd8] sm:$0xff]
        %v241 = vld [vmem:[%s212 + $0xe0] sm:$0xff]
        %v242 = vld [vmem:[%s212 + $0xe8] sm:$0x3]
        %v243 = vpack.c.bf16 %v213, %v213
        %v244 = vpack.c.bf16 %v214, %v214
        %v245 = vpack.c.bf16 %v215, %v215
        %v246 = vpack.c.bf16 %v216, %v216
        %v247 = vpack.c.bf16 %v217, %v217
        %v248 = vpack.c.bf16 %v218, %v218
        %v249 = vpack.c.bf16 %v219, %v219
        %v250 = vpack.c.bf16 %v220, %v220
        %v251 = vpack.c.bf16 %v221, %v221
        %v252 = vpack.c.bf16 %v222, %v222
        %v253 = vpack.c.bf16 %v223, %v223
        %v254 = vpack.c.bf16 %v224, %v224
        %v255 = vpack.c.bf16 %v225, %v225
        %v256 = vpack.c.bf16 %v226, %v226
        %v257 = vpack.c.bf16 %v227, %v227
        %v258 = vpack.c.bf16 %v228, %v228
        %v259 = vpack.c.bf16 %v229, %v229
        %v260 = vpack.c.bf16 %v230, %v230
        %v261 = vpack.c.bf16 %v231, %v231
        %v262 = vpack.c.bf16 %v232, %v232
        %v263 = vpack.c.bf16 %v233, %v233
        %v264 = vpack.c.bf16 %v234, %v234
        %v265 = vpack.c.bf16 %v235, %v235
        %v266 = vpack.c.bf16 %v236, %v236
        %v267 = vpack.c.bf16 %v237, %v237
        %v268 = vpack.c.bf16 %v238, %v238
        %v269 = vpack.c.bf16 %v239, %v239
        %v270 = vpack.c.bf16 %v240, %v240
        %v271 = vpack.c.bf16 %v241, %v241
        %v272 = vpack.c.bf16 %v242, %v242
        %v297 = vunpack.c.l.b16 %v243
        %v298 = vunpack.c.l.b16 %v244
        %v299 = vunpack.c.l.b16 %v245
        %v300 = vunpack.c.l.b16 %v246
        %v301 = vunpack.c.l.b16 %v247
        %v302 = vunpack.c.l.b16 %v248
        %v303 = vunpack.c.l.b16 %v249
        %v304 = vunpack.c.l.b16 %v250
        %v305 = vunpack.c.l.b16 %v251
        %v306 = vunpack.c.l.b16 %v252
        %v307 = vunpack.c.l.b16 %v253
        %v308 = vunpack.c.l.b16 %v254
        %v309 = vunpack.c.l.b16 %v255
        %v310 = vunpack.c.l.b16 %v256
        %v311 = vunpack.c.l.b16 %v257
        %v312 = vunpack.c.l.b16 %v258
        %v313 = vunpack.c.l.b16 %v259
        %v314 = vunpack.c.l.b16 %v260
        %v315 = vunpack.c.l.b16 %v261
        %v316 = vunpack.c.l.b16 %v262
        %v317 = vunpack.c.l.b16 %v263
        %v318 = vunpack.c.l.b16 %v264
        %v319 = vunpack.c.l.b16 %v265
        %v320 = vunpack.c.l.b16 %v266
        %v321 = vpack.c.b16 %v298, %v297
        %v322 = vpack.c.b16 %v299, %v299
        %v323 = vpack.c.b16 %v301, %v300
        %v324 = vpack.c.b16 %v302, %v302
        %v325 = vpack.c.b16 %v304, %v303
        %v326 = vpack.c.b16 %v305, %v305
        %v327 = vpack.c.b16 %v307, %v306
        %v328 = vpack.c.b16 %v308, %v308
        %v329 = vpack.c.b16 %v310, %v309
        %v330 = vpack.c.b16 %v311, %v311
        %v331 = vpack.c.b16 %v313, %v312
        %v332 = vpack.c.b16 %v314, %v314
        %v333 = vpack.c.b16 %v316, %v315
        %v334 = vpack.c.b16 %v317, %v317
        %v335 = vpack.c.b16 %v319, %v318
        %v336 = vpack.c.b16 %v320, %v320
        %v340 = vunpack.c.l.b16 %v267
        %v341 = vunpack.c.l.b16 %v268
        %v342 = vunpack.c.l.b16 %v269
        %v343 = vpack.c.b16 %v341, %v340
        %v344 = vpack.c.b16 %v342, %v342
        %345 = vrot.lane.b32.xlu0 %v323, 4
        %v346 = vpop.permute.xlu0 %345
        %347 = vrot.lane.b32.xlu0 %v324, 4
        %v348 = vpop.permute.xlu0 %347
        %349 = vrot.lane.b32.xlu0 %v325, 4
        %v350 = vpop.permute.xlu0 %349
        %351 = vrot.lane.b32.xlu0 %v326, 4
        %v352 = vpop.permute.xlu0 %351
        %353 = vrot.lane.b32.xlu0 %v327, 4
        %v354 = vpop.permute.xlu0 %353
        %355 = vrot.lane.b32.xlu0 %v328, 4
        %v356 = vpop.permute.xlu0 %355
        %357 = vrot.lane.b32.xlu0 %v329, 4
        %v358 = vpop.permute.xlu0 %357
        %359 = vrot.lane.b32.xlu0 %v330, 4
        %v360 = vpop.permute.xlu0 %359
        %361 = vrot.lane.b32.xlu0 %v331, 4
        %v362 = vpop.permute.xlu0 %361
        %363 = vrot.lane.b32.xlu0 %v332, 4
        %v364 = vpop.permute.xlu0 %363
        %365 = vrot.lane.b32.xlu0 %v333, 4
        %v366 = vpop.permute.xlu0 %365
        %367 = vrot.lane.b32.xlu0 %v334, 4
        %v368 = vpop.permute.xlu0 %367
        %369 = vrot.lane.b32.xlu0 %v335, 4
        %v370 = vpop.permute.xlu0 %369
        %371 = vrot.lane.b32.xlu0 %v336, 4
        %v372 = vpop.permute.xlu0 %371
        %373 = vrot.lane.b32.xlu0 %v343, 4
        %v374 = vpop.permute.xlu0 %373
        %375 = vrot.lane.b32.xlu0 %v344, 4
        %v376 = vpop.permute.xlu0 %375
        %v380 = vunpack.c.l.b16 %v270
        %v381 = vunpack.c.l.b16 %v271
        %v382 = vunpack.c.l.b16 %v272
        %v383 = vpack.c.b16 %v381, %v380
        %v384 = vpack.c.b16 %v382, %v382
        %385 = vrot.lane.b32.xlu0 %v325, 8
        %v386 = vpop.permute.xlu0 %385
        %387 = vrot.lane.b32.xlu0 %v326, 8
        %v388 = vpop.permute.xlu0 %387
        %389 = vrot.lane.b32.xlu0 %v327, 8
        %v390 = vpop.permute.xlu0 %389
        %391 = vrot.lane.b32.xlu0 %v328, 8
        %v392 = vpop.permute.xlu0 %391
        %393 = vrot.lane.b32.xlu0 %v329, 8
        %v394 = vpop.permute.xlu0 %393
        %395 = vrot.lane.b32.xlu0 %v330, 8
        %v396 = vpop.permute.xlu0 %395
        %397 = vrot.lane.b32.xlu0 %v331, 8
        %v398 = vpop.permute.xlu0 %397
        %399 = vrot.lane.b32.xlu0 %v332, 8
        %v400 = vpop.permute.xlu0 %399
        %401 = vrot.lane.b32.xlu0 %v333, 8
        %v402 = vpop.permute.xlu0 %401
        %403 = vrot.lane.b32.xlu0 %v334, 8
        %v404 = vpop.permute.xlu0 %403
        %405 = vrot.lane.b32.xlu0 %v335, 8
        %v406 = vpop.permute.xlu0 %405
        %407 = vrot.lane.b32.xlu0 %v336, 8
        %v408 = vpop.permute.xlu0 %407
        %409 = vrot.lane.b32.xlu0 %v343, 8
        %v410 = vpop.permute.xlu0 %409
        %411 = vrot.lane.b32.xlu0 %v344, 8
        %v412 = vpop.permute.xlu0 %411
        %413 = vrot.lane.b32.xlu0 %v383, 8
        %v414 = vpop.permute.xlu0 %413
        %415 = vrot.lane.b32.xlu0 %v384, 8
        %v416 = vpop.permute.xlu0 %415
        %vm417 = vcmask 31744
        %v420 = vsel %vm417, %v321, %v346
        %v423 = vsel %vm417, %v322, %v348
        %v426 = vsel %vm417, %v323, %v350
        %v429 = vsel %vm417, %v324, %v352
        %v432 = vsel %vm417, %v325, %v354
        %v435 = vsel %vm417, %v326, %v356
        %v438 = vsel %vm417, %v327, %v358
        %v441 = vsel %vm417, %v328, %v360
        %v444 = vsel %vm417, %v329, %v362
        %v447 = vsel %vm417, %v330, %v364
        %v450 = vsel %vm417, %v331, %v366
        %v453 = vsel %vm417, %v332, %v368
        %v456 = vsel %vm417, %v333, %v370
        %v459 = vsel %vm417, %v334, %v372
        %v462 = vsel %vm417, %v335, %v374
        %v465 = vsel %vm417, %v336, %v376
        %vm466 = vcmask 64512
        %v468 = vsel %vm466, %v420, %v386
        %v470 = vsel %vm466, %v423, %v388
        %v472 = vsel %vm466, %v426, %v390
        %v474 = vsel %vm466, %v429, %v392
        %v476 = vsel %vm466, %v432, %v394
        %v478 = vsel %vm466, %v435, %v396
        %v480 = vsel %vm466, %v438, %v398
        %v482 = vsel %vm466, %v441, %v400
        %v484 = vsel %vm466, %v444, %v402
        %v486 = vsel %vm466, %v447, %v404
        %v488 = vsel %vm466, %v450, %v406
        %v490 = vsel %vm466, %v453, %v408
        %v492 = vsel %vm466, %v456, %v410
        %v494 = vsel %vm466, %v459, %v412
        %v496 = vsel %vm466, %v462, %v414
        %v498 = vsel %vm466, %v465, %v416
        %vm499 = vsmask.f32 7424
        %v500 = vshrl.u32 %v468, 16
        %v502 = vshll.u32 %v468, 16
        %v504 = vrot.slane %v502, 1
        %v505 = vor.u32 %v500, %v504
        %v506 = vshll.u32 %v470, 16
        %v508 = vrot.slane %v506, 1
        %v509 = vsel %vm499, %v505, %v508
        %v510 = vshrl.u32 %v472, 16
        %v512 = vshll.u32 %v472, 16
        %v514 = vrot.slane %v512, 1
        %v515 = vor.u32 %v510, %v514
        %v516 = vshll.u32 %v474, 16
        %v518 = vrot.slane %v516, 1
        %v519 = vsel %vm499, %v515, %v518
        %v520 = vshrl.u32 %v476, 16
        %v522 = vshll.u32 %v476, 16
        %v524 = vrot.slane %v522, 1
        %v525 = vor.u32 %v520, %v524
        %v526 = vshll.u32 %v478, 16
        %v528 = vrot.slane %v526, 1
        %v529 = vsel %vm499, %v525, %v528
        %v530 = vshrl.u32 %v480, 16
        %v532 = vshll.u32 %v480, 16
        %v534 = vrot.slane %v532, 1
        %v535 = vor.u32 %v530, %v534
        %v536 = vshll.u32 %v482, 16
        %v538 = vrot.slane %v536, 1
        %v539 = vsel %vm499, %v535, %v538
        %v540 = vshrl.u32 %v484, 16
        %v542 = vshll.u32 %v484, 16
        %v544 = vrot.slane %v542, 1
        %v545 = vor.u32 %v540, %v544
        %v546 = vshll.u32 %v486, 16
        %v548 = vrot.slane %v546, 1
        %v549 = vsel %vm499, %v545, %v548
        %v550 = vshrl.u32 %v488, 16
        %v552 = vshll.u32 %v488, 16
        %v554 = vrot.slane %v552, 1
        %v555 = vor.u32 %v550, %v554
        %v556 = vshll.u32 %v490, 16
        %v558 = vrot.slane %v556, 1
        %v559 = vsel %vm499, %v555, %v558
        %v560 = vshrl.u32 %v492, 16
        %v562 = vshll.u32 %v492, 16
        %v564 = vrot.slane %v562, 1
        %v565 = vor.u32 %v560, %v564
        %v566 = vshll.u32 %v494, 16
        %v568 = vrot.slane %v566, 1
        %v569 = vsel %vm499, %v565, %v568
        %v570 = vshrl.u32 %v496, 16
        %v572 = vshll.u32 %v496, 16
        %v574 = vrot.slane %v572, 1
        %v575 = vor.u32 %v570, %v574
        %v576 = vshll.u32 %v498, 16
        %v578 = vrot.slane %v576, 1
        %v579 = vsel %vm499, %v575, %v578
        %580 = vrot.lane.b32.xlu0 %v509, 12
        %v581 = vpop.permute.xlu0 %580
        %582 = vrot.lane.b32.xlu0 %v519, 12
        %v583 = vpop.permute.xlu0 %582
        %584 = vrot.lane.b32.xlu0 %v529, 12
        %v585 = vpop.permute.xlu0 %584
        %586 = vrot.lane.b32.xlu0 %v539, 12
        %v587 = vpop.permute.xlu0 %586
        %588 = vrot.lane.b32.xlu0 %v549, 12
        %v589 = vpop.permute.xlu0 %588
        %590 = vrot.lane.b32.xlu0 %v559, 12
        %v591 = vpop.permute.xlu0 %590
        %592 = vrot.lane.b32.xlu0 %v569, 12
        %v593 = vpop.permute.xlu0 %592
        %594 = vrot.lane.b32.xlu0 %v579, 12
        %v595 = vpop.permute.xlu0 %594
        %vm612 = vcmask 1046528
        %v613 = vrot.slane %v468, 1
        %v614 = vrot.slane %v470, 1
        %v615 = vsel %vm612, %v613, %v614
        %v616 = vrot.slane %v472, 1
        %v617 = vrot.slane %v474, 1
        %v618 = vsel %vm612, %v616, %v617
        %v619 = vrot.slane %v476, 1
        %v620 = vrot.slane %v478, 1
        %v621 = vsel %vm612, %v619, %v620
        %v622 = vrot.slane %v480, 1
        %v623 = vrot.slane %v482, 1
        %v624 = vsel %vm612, %v622, %v623
        %v625 = vrot.slane %v484, 1
        %v626 = vrot.slane %v486, 1
        %v627 = vsel %vm612, %v625, %v626
        %v628 = vrot.slane %v488, 1
        %v629 = vrot.slane %v490, 1
        %v630 = vsel %vm612, %v628, %v629
        %v631 = vrot.slane %v492, 1
        %v632 = vrot.slane %v494, 1
        %v633 = vsel %vm612, %v631, %v632
        %v634 = vrot.slane %v496, 1
        %v635 = vrot.slane %v498, 1
        %v636 = vsel %vm612, %v634, %v635
        %637 = vrot.lane.b32.xlu0 %v615, 24
        %v638 = vpop.permute.xlu0 %637
        %639 = vrot.lane.b32.xlu0 %v618, 24
        %v640 = vpop.permute.xlu0 %639
        %641 = vrot.lane.b32.xlu0 %v621, 24
        %v642 = vpop.permute.xlu0 %641
        %643 = vrot.lane.b32.xlu0 %v624, 24
        %v644 = vpop.permute.xlu0 %643
        %645 = vrot.lane.b32.xlu0 %v627, 24
        %v646 = vpop.permute.xlu0 %645
        %647 = vrot.lane.b32.xlu0 %v630, 24
        %v648 = vpop.permute.xlu0 %647
        %649 = vrot.lane.b32.xlu0 %v633, 24
        %v650 = vpop.permute.xlu0 %649
        %651 = vrot.lane.b32.xlu0 %v636, 24
        %v652 = vpop.permute.xlu0 %651
        %vm653 = vcmask 97280
        %v655 = vsel %vm653, %v468, %v581
        %v657 = vsel %vm653, %v472, %v583
        %v659 = vsel %vm653, %v476, %v585
        %v661 = vsel %vm653, %v480, %v587
        %v663 = vsel %vm653, %v484, %v589
        %v665 = vsel %vm653, %v488, %v591
        %v667 = vsel %vm653, %v492, %v593
        %v669 = vsel %vm653, %v496, %v595
        %vm670 = vcmask 195584
        %v672 = vsel %vm670, %v655, %v638
        %v674 = vsel %vm670, %v657, %v640
        %v676 = vsel %vm670, %v659, %v642
        %v678 = vsel %vm670, %v661, %v644
        %v680 = vsel %vm670, %v663, %v646
        %v682 = vsel %vm670, %v665, %v648
        %v684 = vsel %vm670, %v667, %v650
        %v686 = vsel %vm670, %v669, %v652
        %vm687 = vcmask 293888
        %v689 = vsel %vm687, %v672, 0
        %v691 = vsel %vm687, %v674, 0
        %v693 = vsel %vm687, %v676, 0
        %v695 = vsel %vm687, %v678, 0
        %v697 = vsel %vm687, %v680, 0
        %v699 = vsel %vm687, %v682, 0
        %v701 = vsel %vm687, %v684, 0
        %v703 = vsel %vm687, %v686, 0
        %v705 = vld [vmem:[%s1] sm:$0xf]
        %v706 = vld [vmem:[%s1 + $0x4] sm:$0xf]
        %v707 = vld [vmem:[%s1 + $0x8] sm:$0xf]
        %v708 = vld [vmem:[%s1 + $0xc] sm:$0xf]
        %v709 = vld [vmem:[%s1 + $0x10] sm:$0xf]
        %v710 = vld [vmem:[%s1 + $0x14] sm:$0xf]
        %v711 = vld [vmem:[%s1 + $0x18] sm:$0xf]
        %v712 = vld [vmem:[%s1 + $0x1c] sm:$0xf]
        %v713 = vld [vmem:[%s1 + $0x20] sm:$0xf]
        %v714 = vld [vmem:[%s1 + $0x24] sm:$0xf]
        %v715 = vld [vmem:[%s1 + $0x28] sm:$0xf]
        %v716 = vld [vmem:[%s1 + $0x2c] sm:$0xf]
        %v717 = vld [vmem:[%s1 + $0x30] sm:$0xf]
        %v718 = vld [vmem:[%s1 + $0x34] sm:$0xf]
        %v719 = vld [vmem:[%s1 + $0x38] sm:$0xf]
        %v720 = vld [vmem:[%s1 + $0x3c] sm:$0xf]
        %v737 = vunpack.c.l.b16 %v705
        %v738 = vunpack.c.l.b16 %v706
        %v739 = vunpack.c.l.b16 %v707
        %v740 = vunpack.c.l.b16 %v708
        %v741 = vunpack.c.l.b16 %v709
        %v742 = vunpack.c.l.b16 %v710
        %v743 = vunpack.c.l.b16 %v711
        %v744 = vunpack.c.l.b16 %v712
        %v745 = vunpack.c.l.b16 %v713
        %v746 = vunpack.c.l.b16 %v714
        %v747 = vunpack.c.l.b16 %v715
        %v748 = vunpack.c.l.b16 %v716
        %v749 = vunpack.c.l.b16 %v717
        %v750 = vunpack.c.l.b16 %v718
        %v751 = vunpack.c.l.b16 %v719
        %v752 = vunpack.c.l.b16 %v720
        %v753 = vpack.c.b16 %v738, %v737
        %v754 = vpack.c.b16 %v740, %v739
        %v755 = vpack.c.b16 %v742, %v741
        %v756 = vpack.c.b16 %v744, %v743
        %v757 = vpack.c.b16 %v746, %v745
        %v758 = vpack.c.b16 %v748, %v747
        %v759 = vpack.c.b16 %v750, %v749
        %v760 = vpack.c.b16 %v752, %v751
        %769 = vmatpush.bf16.msra.mxu0 %v760
        %770 = vmatpush.bf16.msra.mxu0 %v759
        %771 = vmatpush.bf16.msra.mxu0 %v758
        %772 = vmatpush.bf16.msra.mxu0 %v757
        %773 = vmatpush.bf16.msra.mxu0 %v756
        %774 = vmatpush.bf16.msra.mxu0 %v755
        %775 = vmatpush.bf16.msra.mxu0 %v754
        %776 = vmatpush.bf16.msra.mxu0 %v753
        %777 = vmatmul.bf16.gmra.mxu0 %v689
        %v778 = vpop.f32.mrf.mxu0
        %v779 = vadd.f32 0.0, %v778
        %v780 = vpop.f32.mrf.mxu0
        %v781 = vadd.f32 0.0, %v780
        %782 = vmatmul.bf16.gmra.mxu0 %v691
        %v783 = vpop.f32.mrf.mxu0
        %v784 = vadd.f32 0.0, %v783
        %v785 = vpop.f32.mrf.mxu0
        %v786 = vadd.f32 0.0, %v785
        %787 = vmatmul.bf16.gmra.mxu0 %v693
        %v788 = vpop.f32.mrf.mxu0
        %v789 = vadd.f32 0.0, %v788
        %v790 = vpop.f32.mrf.mxu0
        %v791 = vadd.f32 0.0, %v790
        %792 = vmatmul.bf16.gmra.mxu0 %v695
        %v793 = vpop.f32.mrf.mxu0
        %v794 = vadd.f32 0.0, %v793
        %v795 = vpop.f32.mrf.mxu0
        %v796 = vadd.f32 0.0, %v795
        %797 = vmatmul.bf16.gmra.mxu0 %v697
        %v798 = vpop.f32.mrf.mxu0
        %v799 = vadd.f32 0.0, %v798
        %v800 = vpop.f32.mrf.mxu0
        %v801 = vadd.f32 0.0, %v800
        %802 = vmatmul.bf16.gmra.mxu0 %v699
        %v803 = vpop.f32.mrf.mxu0
        %v804 = vadd.f32 0.0, %v803
        %v805 = vpop.f32.mrf.mxu0
        %v806 = vadd.f32 0.0, %v805
        %807 = vmatmul.bf16.gmra.mxu0 %v701
        %v808 = vpop.f32.mrf.mxu0
        %v809 = vadd.f32 0.0, %v808
        %v810 = vpop.f32.mrf.mxu0
        %v811 = vadd.f32 0.0, %v810
        %812 = vmatmul.bf16.gmra.mxu0 %v703
        %v813 = vpop.f32.mrf.mxu0
        %v814 = vadd.f32 0.0, %v813
        %v815 = vpop.f32.mrf.mxu0
        %v816 = vadd.f32 0.0, %v815
        %817 = vdwg.mxu0
        %818 = vst.msk [vmem:[%s207] sm:$0xff] %vm466, %v779
        %819 = vst.msk [vmem:[%s207 + $0x8] sm:$0xff] %vm466, %v781
        %820 = vst.msk [vmem:[%s207 + $0x10] sm:$0xff] %vm466, %v784
        %821 = vst.msk [vmem:[%s207 + $0x18] sm:$0xff] %vm466, %v786
        %822 = vst.msk [vmem:[%s207 + $0x20] sm:$0xff] %vm466, %v789
        %823 = vst.msk [vmem:[%s207 + $0x28] sm:$0xff] %vm466, %v791
        %824 = vst.msk [vmem:[%s207 + $0x30] sm:$0xff] %vm466, %v794
        %825 = vst.msk [vmem:[%s207 + $0x38] sm:$0xff] %vm466, %v796
        %826 = vst.msk [vmem:[%s207 + $0x40] sm:$0xff] %vm466, %v799
        %827 = vst.msk [vmem:[%s207 + $0x48] sm:$0xff] %vm466, %v801
        %828 = vst.msk [vmem:[%s207 + $0x50] sm:$0xff] %vm466, %v804
        %829 = vst.msk [vmem:[%s207 + $0x58] sm:$0xff] %vm466, %v806
        %830 = vst.msk [vmem:[%s207 + $0x60] sm:$0xff] %vm466, %v809
        %831 = vst.msk [vmem:[%s207 + $0x68] sm:$0xff] %vm466, %v811
        %832 = vst.msk [vmem:[%s207 + $0x70] sm:$0xff] %vm466, %v814
        %833 = vst.msk [vmem:[%s207 + $0x78] sm:$0xff] %vm466, %v816
        %v834 = vsel %vm466, %v779, 0.0
        %v835 = vsel %vm466, %v781, 0.0
        %v836 = vadd.f32 %v834, %v835
        %v837 = vsel %vm466, %v784, 0.0
        %v838 = vadd.f32 %v836, %v837
        %v839 = vsel %vm466, %v786, 0.0
        %v840 = vadd.f32 %v838, %v839
        %v841 = vsel %vm466, %v789, 0.0
        %v842 = vadd.f32 %v840, %v841
        %v843 = vsel %vm466, %v791, 0.0
        %v844 = vadd.f32 %v842, %v843
        %v845 = vsel %vm466, %v794, 0.0
        %v846 = vadd.f32 %v844, %v845
        %v847 = vsel %vm466, %v796, 0.0
        %v848 = vadd.f32 %v846, %v847
        %v849 = vsel %vm466, %v799, 0.0
        %v850 = vadd.f32 %v848, %v849
        %v851 = vsel %vm466, %v801, 0.0
        %v852 = vadd.f32 %v850, %v851
        %v853 = vsel %vm466, %v804, 0.0
        %v854 = vadd.f32 %v852, %v853
        %v855 = vsel %vm466, %v806, 0.0
        %v856 = vadd.f32 %v854, %v855
        %v857 = vsel %vm466, %v809, 0.0
        %v858 = vadd.f32 %v856, %v857
        %v859 = vsel %vm466, %v811, 0.0
        %v860 = vadd.f32 %v858, %v859
        %v861 = vsel %vm466, %v814, 0.0
        %v862 = vadd.f32 %v860, %v861
        %v863 = vsel %vm466, %v816, 0.0
        %v864 = vadd.f32 %v862, %v863
        %v865 = vrot.slane %v864, 4
        %v866 = vadd.f32 %v864, %v865
        %v867 = vrot.slane %v866, 2
        %v868 = vadd.f32 %v866, %v867
        %v869 = vrot.slane %v868, 1
        %v870 = vadd.f32 %v868, %v869
        %v871 = vmul.f32 %v779, %v779
        %v872 = vmul.f32 %v781, %v781
        %v873 = vmul.f32 %v784, %v784
        %v874 = vmul.f32 %v786, %v786
        %v875 = vmul.f32 %v789, %v789
        %v876 = vmul.f32 %v791, %v791
        %v877 = vmul.f32 %v794, %v794
        %v878 = vmul.f32 %v796, %v796
        %v879 = vmul.f32 %v799, %v799
        %v880 = vmul.f32 %v801, %v801
        %v881 = vmul.f32 %v804, %v804
        %v882 = vmul.f32 %v806, %v806
        %v883 = vmul.f32 %v809, %v809
        %v884 = vmul.f32 %v811, %v811
        %v885 = vmul.f32 %v814, %v814
        %v886 = vmul.f32 %v816, %v816
        %v887 = vsel %vm466, %v871, 0.0
        %v888 = vsel %vm466, %v872, 0.0
        %v889 = vadd.f32 %v887, %v888
        %v890 = vsel %vm466, %v873, 0.0
        %v891 = vadd.f32 %v889, %v890
        %v892 = vsel %vm466, %v874, 0.0
        %v893 = vadd.f32 %v891, %v892
        %v894 = vsel %vm466, %v875, 0.0
        %v895 = vadd.f32 %v893, %v894
        %v896 = vsel %vm466, %v876, 0.0
        %v897 = vadd.f32 %v895, %v896
        %v898 = vsel %vm466, %v877, 0.0
        %v899 = vadd.f32 %v897, %v898
        %v900 = vsel %vm466, %v878, 0.0
        %v901 = vadd.f32 %v899, %v900
        %v902 = vsel %vm466, %v879, 0.0
        %v903 = vadd.f32 %v901, %v902
        %v904 = vsel %vm466, %v880, 0.0
        %v905 = vadd.f32 %v903, %v904
        %v906 = vsel %vm466, %v881, 0.0
        %v907 = vadd.f32 %v905, %v906
        %v908 = vsel %vm466, %v882, 0.0
        %v909 = vadd.f32 %v907, %v908
        %v910 = vsel %vm466, %v883, 0.0
        %v911 = vadd.f32 %v909, %v910
        %v912 = vsel %vm466, %v884, 0.0
        %v913 = vadd.f32 %v911, %v912
        %v914 = vsel %vm466, %v885, 0.0
        %v915 = vadd.f32 %v913, %v914
        %v916 = vsel %vm466, %v886, 0.0
        %v917 = vadd.f32 %v915, %v916
        %v918 = vrot.slane %v917, 4
        %v919 = vadd.f32 %v917, %v918
        %v920 = vrot.slane %v919, 2
        %v921 = vadd.f32 %v919, %v920
        %v922 = vrot.slane %v921, 1
        %v923 = vadd.f32 %v921, %v922
        %vm924 = vcmask 1040384
        %v925 = vsel %vm924, %v870, %v923
        %vm926 = vcmask 58368
        %927 = vst.msk [vmem:[%s192] sm:$0x3] %vm926, %v925
        %s928 = smul.u32 8, %s23
        %p929 = scmp.lt.s32.totalorder %s22, 1
        %s930 = scalar_select %p929, %s22, 1
        %p931 = scmp.lt.s32.totalorder %s928, 15
        %s932 = scalar_select %p931, %s928, 15
        %s933 = smul.addr %s932, 2
        %s934 = smul.addr %s930, 32
        %s935 = sadd.s32 %s933, %s934
        %s936 = smul.addr %s935, 8
        %s937 = scalar_lea.vmem %s2, %s936
        %s938 = sand.u32 %s115, 1
        %s939 = scalar_lea.sflag [#allocation3], %s938
        %s940 = sand.u32 %s115, 1
        %s941 = smul.addr %s940, 2
        %s942 = scalar_lea.vmem [#allocation2], %s941
        // Predicated region
        $region29: #{tpu_custom_call.1} parent=27 // pred_check
          %p943 = pneg %p97
        $region30: #{tpu_custom_call.1} parent=27 // pred_check_branch
          %945 = sbr.rel (%p943) target = $region32
        $region31: #{tpu_custom_call.1} parent=27 // pred_region
          %s946 = smul.u32 8, %s23
        $region32: #{tpu_custom_call.1} parent=27 // pred_fallthru
          _
        // Predicated region
        $region33: #{tpu_custom_call.1} parent=27 // pred_check
          %p947 = pneg %p125
        $region34: #{tpu_custom_call.1} parent=27 // pred_check_branch
          %949 = sbr.rel (%p947) target = $region36
        $region35: #{tpu_custom_call.1} parent=27 // pred_region
          %951 = vsyncadd %s939, 0
          %s952 = smul.addr %s22, 2
          %s953 = sadd.s32 %s23, %s952
          %s954 = smul.addr %s953, 2
          %s955 = scalar_lea.hbm %s3, %s954
          %s957 = sshll.u32 %s942, 4
          %s958 = int_to_ptr.vmem [resolvable:$true] %s957
          %s959 = sshll.u32 %s955, 4
          %s960 = int_to_ptr.hbm [resolvable:$true] %s959
          %962 = dma.vmem_to_hbm [thread:$0]  %s958, 32, %s960, %s939
        $region36: #{tpu_custom_call.1} parent=27 // pred_fallthru
          _
      $region28: #{tpu_custom_call.1} parent=5 // pred_fallthru
        _
      %p963 = scmp.le.s32.totalorder 2, %s13
      // Predicated region
      $region37: #{tpu_custom_call.1} parent=5 // pred_check
        %p964 = pneg %p963
      $region38: #{tpu_custom_call.1} parent=5 // pred_check_branch
        %966 = sbr.rel (%p964) target = $region40
      $region39: #{tpu_custom_call.1} parent=5 // pred_region
        %s967 = ssub.s32 %s13, 2
        // Predicated region
        $region41: #{tpu_custom_call.1} parent=39 // pred_check
          %p968 = pneg %p103
        $region42: #{tpu_custom_call.1} parent=39 // pred_check_branch
          %970 = sbr.rel (%p968) target = $region44
        $region43: #{tpu_custom_call.1} parent=39 // pred_region
          %s971 = smul.u32 8, %s25
          %p972 = scmp.lt.s32.totalorder %s24, 1
          %s973 = scalar_select %p972, %s24, 1
          %p974 = scmp.lt.s32.totalorder %s971, 15
          %s975 = scalar_select %p974, %s971, 15
          %s976 = smul.addr %s975, 2
          %s977 = smul.addr %s973, 32
          %s978 = sadd.s32 %s976, %s977
          %s979 = smul.addr %s978, 8
          %s980 = scalar_lea.vmem %s2, %s979
        $region44: #{tpu_custom_call.1} parent=39 // pred_fallthru
          _
        // Predicated region
        $region45: #{tpu_custom_call.1} parent=39 // pred_check
          %p981 = pneg %p131
        $region46: #{tpu_custom_call.1} parent=39 // pred_check_branch
          %983 = sbr.rel (%p981) target = $region48
        $region47: #{tpu_custom_call.1} parent=39 // pred_region
          %s984 = sand.u32 %s116, 1
          %s985 = scalar_lea.sflag [#allocation3], %s984
          %s986 = sand.u32 %s116, 1
          %s987 = smul.addr %s986, 2
          %s988 = scalar_lea.vmem [#allocation2], %s987
          %990 = dma.done %s985, 32
        $region48: #{tpu_custom_call.1} parent=39 // pred_fallthru
          _
      $region40: #{tpu_custom_call.1} parent=5 // pred_fallthru
        _
    $region6: #{tpu_custom_call.1} parent=1 // loop_footer
      %s17 = sadd.s32 1, %s13
    $region7: #{tpu_custom_call.1} parent=1 // loop_footer_branch
      %12 = sbr.rel target = $region3
    $region8: #{tpu_custom_call.1} parent=1 // loop_exit
      _
    %991 = vsyncpa [#allocation3], 1
    %s992 = scalar_lea.sflag [#allocation3], 1
    %993 = vsyncpa %s992, 1

</llo_original>
